<compile_context>
chip_gen: v7x
topology: tpu7x:2x2x1
jax: 0.10.0
libtpu: 0.0.40
codegen_flags: <defaults>
</compile_context>

<pallas_src>
import jax
import jax.numpy as jnp
import numpy as np
from jax.experimental import pallas as pl
from jax.experimental.pallas import tpu as pltpu

LANE = 128
SUBLANE = 8


def _round_up(x, m):
    return (x + m - 1) // m * m


# ----------------------------- Pallas kernel ---------------------------------
def encoder_dynamic_kernel(xf_ref, xa_ref, eps_ref,
                           w1f_ref, w1a_ref, b1_ref,
                           w2_ref, b2_ref,
                           wh_ref, bh_ref,
                           z_ref, mu_ref, lv_ref):
    """One batch tile of the fused EncoderDynamic forward pass."""
    out_pad = mu_ref.shape[1]
    cdt = jnp.bfloat16

    xf = xf_ref[...].astype(cdt)
    xa = xa_ref[...].astype(cdt)

    # nn[0]: Linear(in_sz, 2H)  -- concat folded into two row-split matmuls
    h1 = jnp.dot(xf, w1f_ref[...], preferred_element_type=jnp.float32)
    h1 = h1 + jnp.dot(xa, w1a_ref[...], preferred_element_type=jnp.float32)
    h1 = jnp.tanh(h1 + b1_ref[...])                              # pr.nl

    # nn[2]: Linear(2H, H) -> tanh
    h2 = jnp.dot(h1.astype(cdt), w2_ref[...],
                 preferred_element_type=jnp.float32) + b2_ref[...]
    h2 = jnp.tanh(h2)                                            # pr.nl

    # fused mu / logvar heads: single Linear(H, 2*out_pad)
    head = jnp.dot(h2.astype(cdt), wh_ref[...],
                   preferred_element_type=jnp.float32) + bh_ref[...]
    mus = jnp.tanh(head[:, :out_pad])                            # mu_nl
    lvs = jnp.tanh(head[:, out_pad:])                            # logvar_nl

    # GaussianDiagDistr.sample_: z = mu + exp(0.5*logvar)*eps ; then mu_nl(z)
    z = jnp.tanh(mus + jnp.exp(0.5 * lvs) * eps_ref[...])

    z_ref[...] = z
    mu_ref[...] = mus
    lv_ref[...] = lvs


# ------------------------------- wrapper --------------------------------------
def encoder_dynamic_forward(x_feats, acts, eps, kparams,
                            out_seq_len, latent_sz, tile_b=1024):
    """Returns (z_smpls (B,L,latent), mus (B*L,latent), logvars (B*L,latent))."""
    B, hist, comp = x_feats.shape
    act_sz = acts.shape[-1]
    out_sz = out_seq_len * latent_sz
    out_pad = kparams["out_pad"]

    feat_flat = hist * comp
    act_flat = hist * act_sz

    # Free (contiguous) reshapes -- no HBM concat materialization.
    xf = x_feats.reshape(B, feat_flat)
    xa = acts.reshape(B, act_flat)

    # Batch tile: multiple of 8 sublanes, large when B is large.
    tb = min(tile_b, max(SUBLANE, _round_up(B, SUBLANE)))
    tb = _round_up(tb, SUBLANE)
    B_pad = _round_up(max(B, tb), tb)
    if B_pad != B:
        xf = jnp.pad(xf, ((0, B_pad - B), (0, 0)))
        xa = jnp.pad(xa, ((0, B_pad - B), (0, 0)))
    eps_p = jnp.pad(eps, ((0, B_pad - B), (0, out_pad - out_sz)))

    w1f, w1a = kparams["w1f"], kparams["w1a"]
    b1, w2, b2 = kparams["b1"], kparams["w2"], kparams["b2"]
    wh, bh = kparams["wh"], kparams["bh"]
    h2n, hn = w1f.shape[1], w2.shape[1]

    grid = (B_pad // tb,)

    def row_spec(cols):
        return pl.BlockSpec((tb, cols), lambda i: (i, 0))

    def resident(arr):  # whole array, same block every step -> stays in VMEM
        return pl.BlockSpec(arr.shape, lambda i: (0, 0))

    flops = 2 * B_pad * (feat_flat * h2n + act_flat * h2n
                         + h2n * hn + hn * 2 * out_pad)
    transcendentals = B_pad * (h2n + hn + 4 * out_pad)
    bytes_accessed = (4 * B_pad * (feat_flat + act_flat + 4 * out_pad)
                      + 2 * (w1f.size + w1a.size + w2.size + wh.size)
                      + 4 * (b1.size + b2.size + bh.size))

    z, mus, lvs = pl.pallas_call(
        encoder_dynamic_kernel,
        out_shape=(
            jax.ShapeDtypeStruct((B_pad, out_pad), jnp.float32),
            jax.ShapeDtypeStruct((B_pad, out_pad), jnp.float32),
            jax.ShapeDtypeStruct((B_pad, out_pad), jnp.float32),
        ),
        grid=grid,
        in_specs=[
            row_spec(feat_flat), row_spec(act_flat), row_spec(out_pad),
            resident(w1f), resident(w1a), resident(b1),
            resident(w2), resident(b2),
            resident(wh), resident(bh),
        ],
        out_specs=(row_spec(out_pad), row_spec(out_pad), row_spec(out_pad)),
        compiler_params=pltpu.CompilerParams(
            dimension_semantics=("parallel",),        # megacore on v7x
            vmem_limit_bytes=32 * 1024 * 1024),       # safe on v5e/v6e/v7x
        cost_estimate=pl.CostEstimate(
            flops=int(flops),
            transcendentals=int(transcendentals),
            bytes_accessed=int(bytes_accessed)),
    )(xf, xa, eps_p, w1f, w1a, b1, w2, b2, wh, bh)

    z = z[:B, :out_sz]
    mus = mus[:B, :out_sz]
    lvs = lvs[:B, :out_sz]
    z_smpls = z.reshape(B, out_seq_len, latent_sz)
    return (z_smpls,
            mus.reshape(B * out_seq_len, latent_sz),
            lvs.reshape(B * out_seq_len, latent_sz))


# ------------------------ parameter init & kernel packing ---------------------
def init_params(key, hist, comp_out_sz, act_sz, hidden_sz, out_sz):
    """PyTorch-layout parameters (W as (in_features, out_features))."""
    in_sz = (comp_out_sz + act_sz) * hist

    def linear(k, fan_in, fan_out):
        kw, kb = jax.random.split(k)
        bound = 1.0 / np.sqrt(fan_in)
        w = jax.random.uniform(kw, (fan_in, fan_out), jnp.float32, -bound, bound)
        b = jax.random.uniform(kb, (1, fan_out), jnp.float32, -bound, bound)
        return w, b

    k1, k2, k3, k4 = jax.random.split(key, 4)
    w1, b1 = linear(k1, in_sz, hidden_sz * 2)
    w2, b2 = linear(k2, hidden_sz * 2, hidden_sz)
    wmu, bmu = linear(k3, hidden_sz, out_sz)
    wlv, blv = linear(k4, hidden_sz, out_sz)
    return dict(w1=w1, b1=b1, w2=w2, b2=b2,
                wmu=wmu, bmu=bmu, wlv=wlv, blv=blv)


def pack_params(params, hist, comp_out_sz, act_sz, out_sz):
    """Kernel layout: w1 rows split into feat/act groups (so the wrapper needs
    no concat), mu/logvar heads fused and lane-padded to 128, weights bf16."""
    group = comp_out_sz + act_sz
    feat_idx = np.concatenate(
        [np.arange(t * group, t * group + comp_out_sz) for t in range(hist)])
    act_idx = np.concatenate(
        [np.arange(t * group + comp_out_sz, (t + 1) * group) for t in range(hist)])

    out_pad = _round_up(out_sz, LANE)
    hidden = params["w2"].shape[1]

    wh = jnp.zeros((hidden, 2 * out_pad), jnp.float32)
    wh = wh.at[:, :out_sz].set(params["wmu"])
    wh = wh.at[:, out_pad:out_pad + out_sz].set(params["wlv"])
    bh = jnp.zeros((1, 2 * out_pad), jnp.float32)
    bh = bh.at[:, :out_sz].set(params["bmu"])
    bh = bh.at[:, out_pad:out_pad + out_sz].set(params["blv"])

    return dict(
        w1f=params["w1"][feat_idx].astype(jnp.bfloat16),
        w1a=params["w1"][act_idx].astype(jnp.bfloat16),
        b1=params["b1"],
        w2=params["w2"].astype(jnp.bfloat16),
        b2=params["b2"],
        wh=wh.astype(jnp.bfloat16),
        bh=bh,
        out_pad=out_pad,
    )


# ----------------------------- pure-JAX reference ------------------------------
def reference_forward(x_feats, acts, eps, params, out_seq_len, latent_sz):
    B = x_feats.shape[0]
    inp = jnp.concatenate([x_feats, acts], axis=-1).reshape(B, -1)
    h1 = jnp.tanh(inp @ params["w1"] + params["b1"])
    h2 = jnp.tanh(h1 @ params["w2"] + params["b2"])
    mus = jnp.tanh(h2 @ params["wmu"] + params["bmu"])
    lvs = jnp.tanh(h2 @ params["wlv"] + params["blv"])
    z = jnp.tanh(mus + jnp.exp(0.5 * lvs) * eps)
    return (z.reshape(B, out_seq_len, latent_sz),
            mus.reshape(B * out_seq_len, latent_sz),
            lvs.reshape(B * out_seq_len, latent_sz))


# ----------------------------------- main --------------------------------------
if __name__ == "__main__":
    # small, module-consistent config
    B = 2
    hist = 4                 # pr.hist  -> in_seq_len
    past, pred = 2, 4        # out_seq_len = past + pred = 6
    comp_out_sz = 8          # pr.comp_out_sz
    act_sz = 4               # pr.act_sz
    hidden_sz = 32           # pr.hidden_sz
    latent_sz = 8

    out_seq_len = past + pred
    out_sz = latent_sz * out_seq_len

    key = jax.random.PRNGKey(0)
    kx, ka, ke, kp = jax.random.split(key, 4)
    x_feats = jax.random.normal(kx, (B, hist, comp_out_sz), jnp.float32)
    acts = jax.random.normal(ka, (B, hist, act_sz), jnp.float32)
    eps = jax.random.normal(ke, (B, out_sz), jnp.float32)  # reparam noise
    params = init_params(kp, hist, comp_out_sz, act_sz, hidden_sz, out_sz)
    kparams = pack_params(params, hist, comp_out_sz, act_sz, out_sz)

    z_smpls, mus, logvars = encoder_dynamic_forward(
        x_feats, acts, eps, kparams, out_seq_len, latent_sz)
    jax.block_until_ready((z_smpls, mus, logvars))

    assert z_smpls.shape == (B, out_seq_len, latent_sz)
    assert mus.shape == (B * out_seq_len, latent_sz)
    assert logvars.shape == (B * out_seq_len, latent_sz)

    # numeric check vs f32 reference (kernel uses bf16 weights -> loose tol)
    z_ref, mu_ref, lv_ref = reference_forward(
        x_feats, acts, eps, params, out_seq_len, latent_sz)
    assert np.allclose(np.asarray(z_smpls), np.asarray(z_ref), atol=5e-2)
    assert np.allclose(np.asarray(mus), np.asarray(mu_ref), atol=5e-2)
    assert np.allclose(np.asarray(logvars), np.asarray(lv_ref), atol=5e-2)

    print("KERNEL_OK")
</pallas_src>

<mosaic_0001>
module attributes {stable_mosaic.version = 11 : i64} {
  func.func @encoder_dynamic_kernel(%arg0: i32, %arg1: memref<8x32xf32, #tpu.memory_space<vmem>>, %arg2: memref<8x16xf32, #tpu.memory_space<vmem>>, %arg3: memref<8x128xf32, #tpu.memory_space<vmem>>, %arg4: memref<32x64xbf16, #tpu.memory_space<vmem>>, %arg5: memref<16x64xbf16, #tpu.memory_space<vmem>>, %arg6: memref<1x64xf32, #tpu.memory_space<vmem>>, %arg7: memref<64x32xbf16, #tpu.memory_space<vmem>>, %arg8: memref<1x32xf32, #tpu.memory_space<vmem>>, %arg9: memref<32x256xbf16, #tpu.memory_space<vmem>>, %arg10: memref<1x256xf32, #tpu.memory_space<vmem>>, %arg11: memref<8x128xf32, #tpu.memory_space<vmem>>, %arg12: memref<8x128xf32, #tpu.memory_space<vmem>>, %arg13: memref<8x128xf32, #tpu.memory_space<vmem>>) attributes {dimension_semantics = [#tpu.dimension_semantics<parallel>], iteration_bounds = array<i64: 1>, scalar_prefetch = 0 : i64, scratch_operands = 0 : i64, tpu.core_type = #tpu.core_type<tc>, window_params = [{transform_indices = @transform_0, window_bounds = array<i64: 8, 32>}, {transform_indices = @transform_1, window_bounds = array<i64: 8, 16>}, {transform_indices = @transform_2, window_bounds = array<i64: 8, 128>}, {pipeline_mode = #tpu.pipeline_mode<synchronous>, transform_indices = @transform_3, window_bounds = array<i64: 32, 64>}, {pipeline_mode = #tpu.pipeline_mode<synchronous>, transform_indices = @transform_4, window_bounds = array<i64: 16, 64>}, {pipeline_mode = #tpu.pipeline_mode<synchronous>, transform_indices = @transform_5, window_bounds = array<i64: 1, 64>}, {pipeline_mode = #tpu.pipeline_mode<synchronous>, transform_indices = @transform_6, window_bounds = array<i64: 64, 32>}, {pipeline_mode = #tpu.pipeline_mode<synchronous>, transform_indices = @transform_7, window_bounds = array<i64: 1, 32>}, {pipeline_mode = #tpu.pipeline_mode<synchronous>, transform_indices = @transform_8, window_bounds = array<i64: 32, 256>}, {pipeline_mode = #tpu.pipeline_mode<synchronous>, transform_indices = @transform_9, window_bounds = array<i64: 1, 256>}, {transform_indices = @transform_10, window_bounds = array<i64: 8, 128>}, {transform_indices = @transform_11, window_bounds = array<i64: 8, 128>}, {transform_indices = @transform_12, window_bounds = array<i64: 8, 128>}]} {
    %c0 = arith.constant 0 : index
    %c0_0 = arith.constant 0 : index
    %0 = vector.load %arg1[%c0, %c0_0] : memref<8x32xf32, #tpu.memory_space<vmem>>, vector<8x32xf32>
    %1 = arith.truncf %0 : vector<8x32xf32> to vector<8x32xbf16>
    %c0_1 = arith.constant 0 : index
    %c0_2 = arith.constant 0 : index
    %2 = vector.load %arg2[%c0_1, %c0_2] : memref<8x16xf32, #tpu.memory_space<vmem>>, vector<8x16xf32>
    %3 = arith.truncf %2 : vector<8x16xf32> to vector<8x16xbf16>
    %c0_3 = arith.constant 0 : index
    %c0_4 = arith.constant 0 : index
    %4 = vector.load %arg4[%c0_3, %c0_4] : memref<32x64xbf16, #tpu.memory_space<vmem>>, vector<32x64xbf16>
    %cst = arith.constant dense<0.000000e+00> : vector<8x64xf32>
    %5 = tpu.matmul %1, %4, %cst {dimension_numbers = #tpu.dot_dimension_numbers<[1], [0], [0], [1], [0, 0, 1, 1], [], []>} : vector<8x32xbf16>, vector<32x64xbf16>, vector<8x64xf32> -> vector<8x64xf32>
    %c0_5 = arith.constant 0 : index
    %c0_6 = arith.constant 0 : index
    %6 = vector.load %arg5[%c0_5, %c0_6] : memref<16x64xbf16, #tpu.memory_space<vmem>>, vector<16x64xbf16>
    %cst_7 = arith.constant dense<0.000000e+00> : vector<8x64xf32>
    %7 = tpu.matmul %3, %6, %cst_7 {dimension_numbers = #tpu.dot_dimension_numbers<[1], [0], [0], [1], [0, 0, 1, 1], [], []>} : vector<8x16xbf16>, vector<16x64xbf16>, vector<8x64xf32> -> vector<8x64xf32>
    %8 = arith.addf %5, %7 : vector<8x64xf32>
    %c0_8 = arith.constant 0 : index
    %c0_9 = arith.constant 0 : index
    %9 = vector.load %arg6[%c0_8, %c0_9] : memref<1x64xf32, #tpu.memory_space<vmem>>, vector<1x64xf32>
    %10 = vector.broadcast %9 : vector<1x64xf32> to vector<8x64xf32>
    %11 = arith.addf %8, %10 : vector<8x64xf32>
    %12 = math.tanh %11 : vector<8x64xf32>
    %13 = arith.truncf %12 : vector<8x64xf32> to vector<8x64xbf16>
    %c0_10 = arith.constant 0 : index
    %c0_11 = arith.constant 0 : index
    %14 = vector.load %arg7[%c0_10, %c0_11] : memref<64x32xbf16, #tpu.memory_space<vmem>>, vector<64x32xbf16>
    %cst_12 = arith.constant dense<0.000000e+00> : vector<8x32xf32>
    %15 = tpu.matmul %13, %14, %cst_12 {dimension_numbers = #tpu.dot_dimension_numbers<[1], [0], [0], [1], [0, 0, 1, 1], [], []>} : vector<8x64xbf16>, vector<64x32xbf16>, vector<8x32xf32> -> vector<8x32xf32>
    %c0_13 = arith.constant 0 : index
    %c0_14 = arith.constant 0 : index
    %16 = vector.load %arg8[%c0_13, %c0_14] : memref<1x32xf32, #tpu.memory_space<vmem>>, vector<1x32xf32>
    %17 = vector.broadcast %16 : vector<1x32xf32> to vector<8x32xf32>
    %18 = arith.addf %15, %17 : vector<8x32xf32>
    %19 = math.tanh %18 : vector<8x32xf32>
    %20 = arith.truncf %19 : vector<8x32xf32> to vector<8x32xbf16>
    %c0_15 = arith.constant 0 : index
    %c0_16 = arith.constant 0 : index
    %21 = vector.load %arg9[%c0_15, %c0_16] : memref<32x256xbf16, #tpu.memory_space<vmem>>, vector<32x256xbf16>
    %cst_17 = arith.constant dense<0.000000e+00> : vector<8x256xf32>
    %22 = tpu.matmul %20, %21, %cst_17 {dimension_numbers = #tpu.dot_dimension_numbers<[1], [0], [0], [1], [0, 0, 1, 1], [], []>} : vector<8x32xbf16>, vector<32x256xbf16>, vector<8x256xf32> -> vector<8x256xf32>
    %c0_18 = arith.constant 0 : index
    %c0_19 = arith.constant 0 : index
    %23 = vector.load %arg10[%c0_18, %c0_19] : memref<1x256xf32, #tpu.memory_space<vmem>>, vector<1x256xf32>
    %24 = vector.broadcast %23 : vector<1x256xf32> to vector<8x256xf32>
    %25 = arith.addf %22, %24 : vector<8x256xf32>
    %26 = vector.extract_strided_slice %25 {offsets = [0, 0], sizes = [8, 128], strides = [1, 1]} : vector<8x256xf32> to vector<8x128xf32>
    %27 = math.tanh %26 : vector<8x128xf32>
    %28 = vector.extract_strided_slice %25 {offsets = [0, 128], sizes = [8, 128], strides = [1, 1]} : vector<8x256xf32> to vector<8x128xf32>
    %29 = math.tanh %28 : vector<8x128xf32>
    %cst_20 = arith.constant 5.000000e-01 : f32
    %30 = vector.broadcast %cst_20 : f32 to vector<8x128xf32>
    %31 = arith.mulf %30, %29 : vector<8x128xf32>
    %32 = math.exp %31 : vector<8x128xf32>
    %c0_21 = arith.constant 0 : index
    %c0_22 = arith.constant 0 : index
    %33 = vector.load %arg3[%c0_21, %c0_22] : memref<8x128xf32, #tpu.memory_space<vmem>>, vector<8x128xf32>
    %34 = arith.mulf %32, %33 : vector<8x128xf32>
    %35 = arith.addf %27, %34 : vector<8x128xf32>
    %36 = math.tanh %35 : vector<8x128xf32>
    %c0_23 = arith.constant 0 : index
    %c0_24 = arith.constant 0 : index
    %37 = vector.load %arg11[%c0_23, %c0_24] : memref<8x128xf32, #tpu.memory_space<vmem>>, vector<8x128xf32>
    tpu.vector_store %arg11[%c0_23, %c0_24], %36 {strides = array<i32>} : memref<8x128xf32, #tpu.memory_space<vmem>>, vector<8x128xf32>,
    %c0_25 = arith.constant 0 : index
    %c0_26 = arith.constant 0 : index
    %38 = vector.load %arg12[%c0_25, %c0_26] : memref<8x128xf32, #tpu.memory_space<vmem>>, vector<8x128xf32>
    tpu.vector_store %arg12[%c0_25, %c0_26], %27 {strides = array<i32>} : memref<8x128xf32, #tpu.memory_space<vmem>>, vector<8x128xf32>,
    %c0_27 = arith.constant 0 : index
    %c0_28 = arith.constant 0 : index
    %39 = vector.load %arg13[%c0_27, %c0_28] : memref<8x128xf32, #tpu.memory_space<vmem>>, vector<8x128xf32>
    tpu.vector_store %arg13[%c0_27, %c0_28], %29 {strides = array<i32>} : memref<8x128xf32, #tpu.memory_space<vmem>>, vector<8x128xf32>,
    return
  }
  func.func @transform_0(%arg0: i32) -> (i32, i32) {
    %c0_i32 = arith.constant 0 : i32
    %c0_i32_0 = arith.constant 0 : i32
    return %arg0, %c0_i32 : i32, i32
  }
  func.func @transform_1(%arg0: i32) -> (i32, i32) {
    %c0_i32 = arith.constant 0 : i32
    %c0_i32_0 = arith.constant 0 : i32
    return %arg0, %c0_i32 : i32, i32
  }
  func.func @transform_2(%arg0: i32) -> (i32, i32) {
    %c0_i32 = arith.constant 0 : i32
    %c0_i32_0 = arith.constant 0 : i32
    return %arg0, %c0_i32 : i32, i32
  }
  func.func @transform_3(%arg0: i32) -> (i32, i32) {
    %c0_i32 = arith.constant 0 : i32
    %c0_i32_0 = arith.constant 0 : i32
    %c0_i32_1 = arith.constant 0 : i32
    return %c0_i32, %c0_i32_0 : i32, i32
  }
  func.func @transform_4(%arg0: i32) -> (i32, i32) {
    %c0_i32 = arith.constant 0 : i32
    %c0_i32_0 = arith.constant 0 : i32
    %c0_i32_1 = arith.constant 0 : i32
    return %c0_i32, %c0_i32_0 : i32, i32
  }
  func.func @transform_5(%arg0: i32) -> (i32, i32) {
    %c0_i32 = arith.constant 0 : i32
    %c0_i32_0 = arith.constant 0 : i32
    %c0_i32_1 = arith.constant 0 : i32
    return %c0_i32, %c0_i32_0 : i32, i32
  }
  func.func @transform_6(%arg0: i32) -> (i32, i32) {
    %c0_i32 = arith.constant 0 : i32
    %c0_i32_0 = arith.constant 0 : i32
    %c0_i32_1 = arith.constant 0 : i32
    return %c0_i32, %c0_i32_0 : i32, i32
  }
  func.func @transform_7(%arg0: i32) -> (i32, i32) {
    %c0_i32 = arith.constant 0 : i32
    %c0_i32_0 = arith.constant 0 : i32
    %c0_i32_1 = arith.constant 0 : i32
    return %c0_i32, %c0_i32_0 : i32, i32
  }
  func.func @transform_8(%arg0: i32) -> (i32, i32) {
    %c0_i32 = arith.constant 0 : i32
    %c0_i32_0 = arith.constant 0 : i32
    %c0_i32_1 = arith.constant 0 : i32
    return %c0_i32, %c0_i32_0 : i32, i32
  }
  func.func @transform_9(%arg0: i32) -> (i32, i32) {
    %c0_i32 = arith.constant 0 : i32
    %c0_i32_0 = arith.constant 0 : i32
    %c0_i32_1 = arith.constant 0 : i32
    return %c0_i32, %c0_i32_0 : i32, i32
  }
  func.func @transform_10(%arg0: i32) -> (i32, i32) {
    %c0_i32 = arith.constant 0 : i32
    %c0_i32_0 = arith.constant 0 : i32
    return %arg0, %c0_i32 : i32, i32
  }
  func.func @transform_11(%arg0: i32) -> (i32, i32) {
    %c0_i32 = arith.constant 0 : i32
    %c0_i32_0 = arith.constant 0 : i32
    return %arg0, %c0_i32 : i32, i32
  }
  func.func @transform_12(%arg0: i32) -> (i32, i32) {
    %c0_i32 = arith.constant 0 : i32
    %c0_i32_0 = arith.constant 0 : i32
    return %arg0, %c0_i32 : i32, i32
  }
}

</mosaic_0001>

<llo_original>
// kernel: tpu_custom_call.1
$region0: #{tpu_custom_call.1}
  #allocation0 [shape = 'u32[]', space=smem, size = 0x4, offset = 0x4, fixed_abs, tag = 'smem constant byte address 0x4 - core index']
  #allocation1 [shape = 'u32[144,128]{1,0:T(1,128)}', space=vmem, size = 0x12000, scoped, tag = 'internal scratch']
  %s0 = inlined_call_operand.hbm [shape: f32[8,32], index: 0, kind: input, shape index: {}]
  %s1 = inlined_call_operand.hbm [shape: f32[8,16], index: 1, kind: input, shape index: {}]
  %s2 = inlined_call_operand.hbm [shape: f32[8,128], index: 2, kind: input, shape index: {}]
  %s3 = inlined_call_operand.vmem [shape: bf16[32,64], index: 3, kind: input, shape index: {}]
  %s4 = inlined_call_operand.hbm [shape: bf16[16,64], index: 4, kind: input, shape index: {}]
  %s5 = inlined_call_operand.vmem [shape: f32[1,64], index: 5, kind: input, shape index: {}]
  %s6 = inlined_call_operand.vmem [shape: bf16[64,32], index: 6, kind: input, shape index: {}]
  %s7 = inlined_call_operand.vmem [shape: f32[1,32], index: 7, kind: input, shape index: {}]
  %s8 = inlined_call_operand.vmem [shape: bf16[32,256], index: 8, kind: input, shape index: {}]
  %s9 = inlined_call_operand.vmem [shape: f32[1,256], index: 9, kind: input, shape index: {}]
  %s10 = inlined_call_operand.hbm [shape: f32[8,128], index: 10, kind: output, shape index: {0}]
  %s11 = inlined_call_operand.hbm [shape: f32[8,128], index: 11, kind: output, shape index: {1}]
  %s12 = inlined_call_operand.hbm [shape: f32[8,128], index: 12, kind: output, shape index: {2}]
  %13 = xla_tuple %s10, %s11, %s12
  %s14 = sld [smem:[#allocation0]]
  $region82: #{tpu_custom_call.1} parent=0
    _
  %s16 = ssub.s32 1, %s14
  %s17 = scalar_select 0, %s16, %s14
  $region1: #{tpu_custom_call.1} parent=0
    #allocation2 [shape = 'u8[4096]{0}', space=vmem, size = 0x1000, scoped, tag = 'input window, operand 0, single buffered']
    #allocation3 [shape = 's32[1]{0}', space=sflag, size = 0x4, scoped, tag = 'scoped memory for tpu_custom_call.1']
    #allocation4 [shape = 's32[1]{0}', space=sflag, size = 0x4, scoped, tag = 'scoped memory for tpu_custom_call.1']
    #allocation5 [shape = 'u8[4096]{0}', space=vmem, size = 0x1000, scoped, tag = 'input window, operand 1, single buffered']
    #allocation6 [shape = 's32[1]{0}', space=sflag, size = 0x4, scoped, tag = 'scoped memory for tpu_custom_call.1']
    #allocation7 [shape = 'u8[4096]{0}', space=vmem, size = 0x1000, scoped, tag = 'input window, operand 2, single buffered']
    #allocation8 [shape = 'u8[4096]{0}', space=vmem, size = 0x1000, scoped, tag = 'input window, operand 4, single buffered']
    #allocation9 [shape = 's32[1]{0}', space=sflag, size = 0x4, scoped, tag = 'scoped memory for tpu_custom_call.1']
    #allocation10 [shape = 'u8[4096]{0}', space=vmem, size = 0x1000, scoped, tag = 'output window, operand 0, single buffered']
    #allocation11 [shape = 'u8[4096]{0}', space=vmem, size = 0x1000, scoped, tag = 'output window, operand 1, single buffered']
    #allocation12 [shape = 's32[1]{0}', space=sflag, size = 0x4, scoped, tag = 'scoped memory for tpu_custom_call.1']
    #allocation13 [shape = 'u8[4096]{0}', space=vmem, size = 0x1000, scoped, tag = 'output window, operand 2, single buffered']
    %18 = vsyncpa [#allocation3], 0
    %19 = vsyncpa [#allocation6], 0
    %20 = vsyncpa [#allocation9], 0
    %21 = vsyncpa [#allocation4], 0
    %22 = vsyncpa [#allocation12], 0
    // Predicated region
    $region2: #{tpu_custom_call.1} parent=1 // pred_check
      _
    $region3: #{tpu_custom_call.1} parent=1 // pred_check_branch
      %24 = sbr.rel (0) target = $region5
    $region4: #{tpu_custom_call.1} parent=1 // pred_region
      %s26 = ssub.s32 128, 128
      %27 = vsyncadd [#allocation3], %s26
      %s29 = sshll.u32 [#allocation2], 4
      %s30 = int_to_ptr.vmem [resolvable:$true] %s29
      %32 = dma.hbm_to_vmem [thread:$0]  %s0, 128, %s30, [#allocation3]
    $region5: #{tpu_custom_call.1} parent=1 // pred_fallthru
      _
    // Predicated region
    $region6: #{tpu_custom_call.1} parent=1 // pred_check
      _
    $region7: #{tpu_custom_call.1} parent=1 // pred_check_branch
      %34 = sbr.rel (0) target = $region9
    $region8: #{tpu_custom_call.1} parent=1 // pred_region
      %s36 = ssub.s32 128, 128
      %37 = vsyncadd [#allocation6], %s36
      %s39 = sshll.u32 [#allocation5], 4
      %s40 = int_to_ptr.vmem [resolvable:$true] %s39
      %42 = dma.hbm_to_vmem [thread:$0]  %s1, 128, %s40, [#allocation6]
    $region9: #{tpu_custom_call.1} parent=1 // pred_fallthru
      _
    // Predicated region
    $region10: #{tpu_custom_call.1} parent=1 // pred_check
      _
    $region11: #{tpu_custom_call.1} parent=1 // pred_check_branch
      %44 = sbr.rel (0) target = $region13
    $region12: #{tpu_custom_call.1} parent=1 // pred_region
      %s46 = ssub.s32 128, 128
      %47 = vsyncadd [#allocation6], %s46
      %s49 = sshll.u32 [#allocation7], 4
      %s50 = int_to_ptr.vmem [resolvable:$true] %s49
      %52 = dma.hbm_to_vmem [thread:$0]  %s2, 128, %s50, [#allocation6]
    $region13: #{tpu_custom_call.1} parent=1 // pred_fallthru
      _
    // Predicated region
    $region14: #{tpu_custom_call.1} parent=1 // pred_check
      _
    $region15: #{tpu_custom_call.1} parent=1 // pred_check_branch
      %54 = sbr.rel (0) target = $region17
    $region16: #{tpu_custom_call.1} parent=1 // pred_region
      _
    $region17: #{tpu_custom_call.1} parent=1 // pred_fallthru
      _
    // Predicated region
    $region18: #{tpu_custom_call.1} parent=1 // pred_check
      _
    $region19: #{tpu_custom_call.1} parent=1 // pred_check_branch
      %56 = sbr.rel (0) target = $region21
    $region20: #{tpu_custom_call.1} parent=1 // pred_region
      %s58 = ssub.s32 128, 128
      %59 = vsyncadd [#allocation9], %s58
      %s60 = sshll.u32 [#allocation8], 4
      %s61 = int_to_ptr.vmem [resolvable:$true] %s60
      %66 = dma.hbm_to_vmem [thread:$0]  %s4, 128, %s61, [#allocation9], 64, 64, 4
    $region21: #{tpu_custom_call.1} parent=1 // pred_fallthru
      _
    // Predicated region
    $region22: #{tpu_custom_call.1} parent=1 // pred_check
      _
    $region23: #{tpu_custom_call.1} parent=1 // pred_check_branch
      %68 = sbr.rel (0) target = $region25
    $region24: #{tpu_custom_call.1} parent=1 // pred_region
      _
    $region25: #{tpu_custom_call.1} parent=1 // pred_fallthru
      _
    // Predicated region
    $region26: #{tpu_custom_call.1} parent=1 // pred_check
      _
    $region27: #{tpu_custom_call.1} parent=1 // pred_check_branch
      %70 = sbr.rel (0) target = $region29
    $region28: #{tpu_custom_call.1} parent=1 // pred_region
      _
    $region29: #{tpu_custom_call.1} parent=1 // pred_fallthru
      _
    // Predicated region
    $region30: #{tpu_custom_call.1} parent=1 // pred_check
      _
    $region31: #{tpu_custom_call.1} parent=1 // pred_check_branch
      %72 = sbr.rel (0) target = $region33
    $region32: #{tpu_custom_call.1} parent=1 // pred_region
      _
    $region33: #{tpu_custom_call.1} parent=1 // pred_fallthru
      _
    // Predicated region
    $region34: #{tpu_custom_call.1} parent=1 // pred_check
      _
    $region35: #{tpu_custom_call.1} parent=1 // pred_check_branch
      %74 = sbr.rel (0) target = $region37
    $region36: #{tpu_custom_call.1} parent=1 // pred_region
      _
    $region37: #{tpu_custom_call.1} parent=1 // pred_fallthru
      _
    // Predicated region
    $region38: #{tpu_custom_call.1} parent=1 // pred_check
      _
    $region39: #{tpu_custom_call.1} parent=1 // pred_check_branch
      %76 = sbr.rel (0) target = $region41
    $region40: #{tpu_custom_call.1} parent=1 // pred_region
      _
    $region41: #{tpu_custom_call.1} parent=1 // pred_fallthru
      _
    // Predicated region
    $region42: #{tpu_custom_call.1} parent=1 // pred_check
      _
    $region43: #{tpu_custom_call.1} parent=1 // pred_check_branch
      %78 = sbr.rel (0) target = $region45
    $region44: #{tpu_custom_call.1} parent=1 // pred_region
      %79 = dma.done [#allocation3], 128
    $region45: #{tpu_custom_call.1} parent=1 // pred_fallthru
      _
    // Predicated region
    $region46: #{tpu_custom_call.1} parent=1 // pred_check
      _
    $region47: #{tpu_custom_call.1} parent=1 // pred_check_branch
      %81 = sbr.rel (0) target = $region49
    $region48: #{tpu_custom_call.1} parent=1 // pred_region
      %82 = dma.done [#allocation6], 128
    $region49: #{tpu_custom_call.1} parent=1 // pred_fallthru
      _
    // Predicated region
    $region50: #{tpu_custom_call.1} parent=1 // pred_check
      _
    $region51: #{tpu_custom_call.1} parent=1 // pred_check_branch
      %84 = sbr.rel (0) target = $region53
    $region52: #{tpu_custom_call.1} parent=1 // pred_region
      %85 = dma.done [#allocation6], 128
    $region53: #{tpu_custom_call.1} parent=1 // pred_fallthru
      _
    // Predicated region
    $region54: #{tpu_custom_call.1} parent=1 // pred_check
      _
    $region55: #{tpu_custom_call.1} parent=1 // pred_check_branch
      %87 = sbr.rel (0) target = $region57
    $region56: #{tpu_custom_call.1} parent=1 // pred_region
      %88 = dma.done [#allocation9], 128
    $region57: #{tpu_custom_call.1} parent=1 // pred_fallthru
      _
    %v90 = vld [vmem:[#allocation2] sm:$0xff]
    %v91 = vpack.c.bf16 %v90, %v90
    %v92 = vld [vmem:[#allocation5] sm:$0xff]
    %v93 = vpack.c.bf16 %v92, %v92
    %v94 = vld [vmem:[%s3] sm:$0xf]
    %v95 = vld [vmem:[%s3 + $0x4] sm:$0xf]
    %v96 = vld [vmem:[%s3 + $0x8] sm:$0xf]
    %v97 = vld [vmem:[%s3 + $0xc] sm:$0xf]
    %v98 = vld [vmem:[#allocation8] sm:$0xf]
    %v99 = vld [vmem:[#allocation8 + $0x4] sm:$0xf]
    %v102 = vunpack.c.l.b16 %v98
    %v103 = vunpack.c.l.b16 %v99
    %v104 = vpack.c.b16 %v103, %v102
    %vm106 = vcmask 130048
    %v108 = vsel %vm106, %v93, 0
    %110 = vmatprep.subr.bf16.mxu0 0
    %111 = vmatpush1.bf16.msra.mxu0 %v104
    %112 = vmatprep.subr.bf16.mxu0 0
    %113 = vmatpush1.bf16.msra.mxu0 0
    %114 = vmatprep.subr.bf16.mxu0 0
    %115 = vmatpush1.bf16.msra.mxu0 0
    %116 = vmatprep.subr.bf16.mxu0 0
    %117 = vmatpush1.bf16.msra.mxu0 0
    %118 = vmatprep.subr.bf16.mxu0 0
    %119 = vmatpush1.bf16.msra.mxu0 0
    %120 = vmatprep.subr.bf16.mxu0 0
    %121 = vmatpush1.bf16.msra.mxu0 0
    %122 = vmatprep.subr.bf16.mxu0 0
    %123 = vmatpush1.bf16.msra.mxu0 0
    %124 = vmatprep.subr.bf16.mxu0 0
    %125 = vmatpush1.bf16.msra.mxu0 0
    %126 = vmatprep.subr.bf16.mxu0 0
    %127 = vmatpush1.bf16.msra.mxu0 0
    %128 = vmatprep.subr.bf16.mxu0 0
    %129 = vmatpush1.bf16.msra.mxu0 0
    %130 = vmatprep.subr.bf16.mxu0 0
    %131 = vmatpush1.bf16.msra.mxu0 0
    %132 = vmatprep.subr.bf16.mxu0 0
    %133 = vmatpush1.bf16.msra.mxu0 0
    %134 = vmatprep.subr.bf16.mxu0 0
    %135 = vmatpush1.bf16.msra.mxu0 0
    %136 = vmatprep.subr.bf16.mxu0 0
    %137 = vmatpush1.bf16.msra.mxu0 0
    %138 = vmatprep.subr.bf16.mxu0 0
    %139 = vmatpush1.bf16.msra.mxu0 0
    %140 = vmatprep.subr.bf16.mxu0 0
    %141 = vmatpush1.bf16.msra.mxu0 0
    %142 = vmatprep.mubr.bf16.mxu0 0
    %143 = vmatmul.mubr.bf16.gmra.mrb[0].mxu0 %v108
    %v144 = vpop.f32.mrb[0].mxu0
    %v145 = vadd.f32 0.0, %v144
    %v146 = vpop.f32.mrb[0].mxu0
    %v147 = vpop.f32.mrb[0].mxu0
    %v148 = vpop.f32.mrb[0].mxu0
    %149 = vdwg.mxu0
    %v154 = vunpack.c.l.b16 %v94
    %v155 = vunpack.c.l.b16 %v95
    %v156 = vunpack.c.l.b16 %v96
    %v157 = vunpack.c.l.b16 %v97
    %v158 = vpack.c.b16 %v155, %v154
    %v159 = vpack.c.b16 %v157, %v156
    %vm162 = vcmask 261120
    %v164 = vsel %vm162, %v91, 0
    %166 = vmatprep.subr.bf16.mxu0 0
    %167 = vmatpush1.bf16.msra.mxu0 %v158
    %168 = vmatprep.subr.bf16.mxu0 0
    %169 = vmatpush1.bf16.msra.mxu0 %v159
    %170 = vmatprep.subr.bf16.mxu0 0
    %171 = vmatpush1.bf16.msra.mxu0 0
    %172 = vmatprep.subr.bf16.mxu0 0
    %173 = vmatpush1.bf16.msra.mxu0 0
    %174 = vmatprep.subr.bf16.mxu0 0
    %175 = vmatpush1.bf16.msra.mxu0 0
    %176 = vmatprep.subr.bf16.mxu0 0
    %177 = vmatpush1.bf16.msra.mxu0 0
    %178 = vmatprep.subr.bf16.mxu0 0
    %179 = vmatpush1.bf16.msra.mxu0 0
    %180 = vmatprep.subr.bf16.mxu0 0
    %181 = vmatpush1.bf16.msra.mxu0 0
    %182 = vmatprep.subr.bf16.mxu0 0
    %183 = vmatpush1.bf16.msra.mxu0 0
    %184 = vmatprep.subr.bf16.mxu0 0
    %185 = vmatpush1.bf16.msra.mxu0 0
    %186 = vmatprep.subr.bf16.mxu0 0
    %187 = vmatpush1.bf16.msra.mxu0 0
    %188 = vmatprep.subr.bf16.mxu0 0
    %189 = vmatpush1.bf16.msra.mxu0 0
    %190 = vmatprep.subr.bf16.mxu0 0
    %191 = vmatpush1.bf16.msra.mxu0 0
    %192 = vmatprep.subr.bf16.mxu0 0
    %193 = vmatpush1.bf16.msra.mxu0 0
    %194 = vmatprep.subr.bf16.mxu0 0
    %195 = vmatpush1.bf16.msra.mxu0 0
    %196 = vmatprep.subr.bf16.mxu0 0
    %197 = vmatpush1.bf16.msra.mxu0 0
    %198 = vmatprep.mubr.bf16.mxu0 0
    %199 = vmatmul.mubr.bf16.gmra.mrb[0].mxu0 %v164
    %v200 = vpop.f32.mrb[0].mxu0
    %v201 = vadd.f32 %v145, %v200
    %v202 = vpop.f32.mrb[0].mxu0
    %v203 = vpop.f32.mrb[0].mxu0
    %v204 = vpop.f32.mrb[0].mxu0
    %205 = vdwg.mxu0
    %v206 = vld [vmem:[%s5] sm:$0x1]
    %v208 = vlaneseq
    %v209 = vshrl.u32 %v208, 7
    %v210 = vsub.s32 0, %v209
    %v211 = vrot.slane %v206, %v210
    %v213 = vadd.f32 %v201, %v211
    %v214 = vtanh.pop %v213
    %v215 = vpack.c.bf16 %v214, %v214
    %v216 = vld [vmem:[%s6] sm:$0xf]
    %v217 = vld [vmem:[%s6 + $0x4] sm:$0xf]
    %v218 = vld [vmem:[%s6 + $0x8] sm:$0xf]
    %v219 = vld [vmem:[%s6 + $0xc] sm:$0xf]
    %v220 = vld [vmem:[%s6 + $0x10] sm:$0xf]
    %v221 = vld [vmem:[%s6 + $0x14] sm:$0xf]
    %v222 = vld [vmem:[%s6 + $0x18] sm:$0xf]
    %v223 = vld [vmem:[%s6 + $0x1c] sm:$0xf]
    %v224 = vld [vmem:[%s7] sm:$0x1]
    %v226 = vlaneseq
    %v227 = vshrl.u32 %v226, 7
    %v228 = vsub.s32 0, %v227
    %v229 = vrot.slane %v224, %v228
    %v239 = vunpack.c.l.b16 %v216
    %v240 = vunpack.c.l.b16 %v217
    %v241 = vunpack.c.l.b16 %v218
    %v242 = vunpack.c.l.b16 %v219
    %v243 = vunpack.c.l.b16 %v220
    %v244 = vunpack.c.l.b16 %v221
    %v245 = vunpack.c.l.b16 %v222
    %v246 = vunpack.c.l.b16 %v223
    %v247 = vpack.c.b16 %v240, %v239
    %v248 = vpack.c.b16 %v242, %v241
    %v249 = vpack.c.b16 %v244, %v243
    %v250 = vpack.c.b16 %v246, %v245
    %vm255 = vcmask 523264
    %v257 = vsel %vm255, %v215, 0
    %259 = vmatprep.subr.bf16.mxu0 0
    %260 = vmatpush1.bf16.msra.mxu0 %v247
    %261 = vmatprep.subr.bf16.mxu0 0
    %262 = vmatpush1.bf16.msra.mxu0 %v248
    %263 = vmatprep.subr.bf16.mxu0 0
    %264 = vmatpush1.bf16.msra.mxu0 %v249
    %265 = vmatprep.subr.bf16.mxu0 0
    %266 = vmatpush1.bf16.msra.mxu0 %v250
    %267 = vmatprep.subr.bf16.mxu0 0
    %268 = vmatpush1.bf16.msra.mxu0 0
    %269 = vmatprep.subr.bf16.mxu0 0
    %270 = vmatpush1.bf16.msra.mxu0 0
    %271 = vmatprep.subr.bf16.mxu0 0
    %272 = vmatpush1.bf16.msra.mxu0 0
    %273 = vmatprep.subr.bf16.mxu0 0
    %274 = vmatpush1.bf16.msra.mxu0 0
    %275 = vmatprep.subr.bf16.mxu0 0
    %276 = vmatpush1.bf16.msra.mxu0 0
    %277 = vmatprep.subr.bf16.mxu0 0
    %278 = vmatpush1.bf16.msra.mxu0 0
    %279 = vmatprep.subr.bf16.mxu0 0
    %280 = vmatpush1.bf16.msra.mxu0 0
    %281 = vmatprep.subr.bf16.mxu0 0
    %282 = vmatpush1.bf16.msra.mxu0 0
    %283 = vmatprep.subr.bf16.mxu0 0
    %284 = vmatpush1.bf16.msra.mxu0 0
    %285 = vmatprep.subr.bf16.mxu0 0
    %286 = vmatpush1.bf16.msra.mxu0 0
    %287 = vmatprep.subr.bf16.mxu0 0
    %288 = vmatpush1.bf16.msra.mxu0 0
    %289 = vmatprep.subr.bf16.mxu0 0
    %290 = vmatpush1.bf16.msra.mxu0 0
    %291 = vmatprep.mubr.bf16.mxu0 0
    %292 = vmatmul.mubr.bf16.gmra.mrb[0].mxu0 %v257
    %v293 = vpop.f32.mrb[0].mxu0
    %v294 = vadd.f32 %v229, %v293
    %v295 = vpop.f32.mrb[0].mxu0
    %v296 = vpop.f32.mrb[0].mxu0
    %v297 = vpop.f32.mrb[0].mxu0
    %298 = vdwg.mxu0
    %v299 = vtanh.pop %v294
    %v300 = vpack.c.bf16 %v299, %v299
    %v301 = vld [vmem:[%s8] sm:$0xff]
    %v302 = vld [vmem:[%s8 + $0x8] sm:$0xff]
    %v303 = vld [vmem:[%s8 + $0x10] sm:$0xff]
    %v304 = vld [vmem:[%s8 + $0x18] sm:$0xff]
    %v305 = vld [vmem:[%s9] sm:$0x3]
    %v307 = vlaneseq
    %v308 = vshrl.u32 %v307, 7
    %v309 = vsub.s32 0, %v308
    %v310 = vrot.slane %v305, %v309
    %v311 = vlaneseq
    %v312 = vshrl.u32 %v311, 7
    %v313 = vsub.s32 1, %v312
    %v314 = vrot.slane %v305, %v313
    %v321 = vunpack.c.l.b16 %v301
    %v322 = vunpack.c.h.b16 %v301
    %v323 = vunpack.c.l.b16 %v302
    %v324 = vunpack.c.h.b16 %v302
    %v325 = vunpack.c.l.b16 %v303
    %v326 = vunpack.c.h.b16 %v303
    %v327 = vunpack.c.l.b16 %v304
    %v328 = vunpack.c.h.b16 %v304
    %v329 = vpack.c.b16 %v323, %v321
    %v330 = vpack.c.b16 %v324, %v322
    %v331 = vpack.c.b16 %v327, %v325
    %v332 = vpack.c.b16 %v328, %v326
    %v338 = vsel %vm162, %v300, 0
    %340 = vmatprep.subr.bf16.mxu0 %v330
    %341 = vmatpush1.bf16.msra.mxu0 %v329
    %342 = vmatprep.subr.bf16.mxu0 %v332
    %343 = vmatpush1.bf16.msra.mxu0 %v331
    %344 = vmatprep.subr.bf16.mxu0 0
    %345 = vmatpush1.bf16.msra.mxu0 0
    %346 = vmatprep.subr.bf16.mxu0 0
    %347 = vmatpush1.bf16.msra.mxu0 0
    %348 = vmatprep.subr.bf16.mxu0 0
    %349 = vmatpush1.bf16.msra.mxu0 0
    %350 = vmatprep.subr.bf16.mxu0 0
    %351 = vmatpush1.bf16.msra.mxu0 0
    %352 = vmatprep.subr.bf16.mxu0 0
    %353 = vmatpush1.bf16.msra.mxu0 0
    %354 = vmatprep.subr.bf16.mxu0 0
    %355 = vmatpush1.bf16.msra.mxu0 0
    %356 = vmatprep.subr.bf16.mxu0 0
    %357 = vmatpush1.bf16.msra.mxu0 0
    %358 = vmatprep.subr.bf16.mxu0 0
    %359 = vmatpush1.bf16.msra.mxu0 0
    %360 = vmatprep.subr.bf16.mxu0 0
    %361 = vmatpush1.bf16.msra.mxu0 0
    %362 = vmatprep.subr.bf16.mxu0 0
    %363 = vmatpush1.bf16.msra.mxu0 0
    %364 = vmatprep.subr.bf16.mxu0 0
    %365 = vmatpush1.bf16.msra.mxu0 0
    %366 = vmatprep.subr.bf16.mxu0 0
    %367 = vmatpush1.bf16.msra.mxu0 0
    %368 = vmatprep.subr.bf16.mxu0 0
    %369 = vmatpush1.bf16.msra.mxu0 0
    %370 = vmatprep.subr.bf16.mxu0 0
    %371 = vmatpush1.bf16.msra.mxu0 0
    %372 = vmatprep.mubr.bf16.mxu0 0
    %373 = vmatmul.mubr.bf16.gmra.mrb[0].mxu0 %v338
    %v374 = vpop.f32.mrb[0].mxu0
    %v375 = vadd.f32 %v310, %v374
    %v376 = vpop.f32.mrb[0].mxu0
    %v377 = vadd.f32 %v314, %v376
    %v378 = vpop.f32.mrb[0].mxu0
    %v379 = vpop.f32.mrb[0].mxu0
    %380 = vdwg.mxu0
    %v381 = vtanh.pop %v375
    %v382 = vtanh.pop %v377
    %v383 = vmul.f32 %v382, 0.5
    %v384 = vmul.f32 %v383, 1.442695
    %v385 = vpow.pop %v384
    %v386 = vld [vmem:[#allocation7] sm:$0xff]
    %v387 = vmul.f32 %v385, %v386
    %v388 = vadd.f32 %v381, %v387
    %v389 = vtanh.pop %v388
    %390 = vst [vmem:[#allocation10] sm:$0xff] %v389
    %391 = vst [vmem:[#allocation11] sm:$0xff] %v381
    %392 = vst [vmem:[#allocation13] sm:$0xff] %v382
    // Predicated region
    $region58: #{tpu_custom_call.1} parent=1 // pred_check
      _
    $region59: #{tpu_custom_call.1} parent=1 // pred_check_branch
      %394 = sbr.rel (0) target = $region61
    $region60: #{tpu_custom_call.1} parent=1 // pred_region
      %s396 = ssub.s32 128, 128
      %397 = vsyncadd [#allocation4], %s396
      %s399 = sshll.u32 [#allocation10], 4
      %s400 = int_to_ptr.vmem [resolvable:$true] %s399
      %402 = dma.vmem_to_hbm [thread:$0]  %s400, 128, %s10, [#allocation4]
    $region61: #{tpu_custom_call.1} parent=1 // pred_fallthru
      _
    // Predicated region
    $region62: #{tpu_custom_call.1} parent=1 // pred_check
      _
    $region63: #{tpu_custom_call.1} parent=1 // pred_check_branch
      %404 = sbr.rel (0) target = $region65
    $region64: #{tpu_custom_call.1} parent=1 // pred_region
      %s406 = ssub.s32 128, 128
      %407 = vsyncadd [#allocation12], %s406
      %s409 = sshll.u32 [#allocation11], 4
      %s410 = int_to_ptr.vmem [resolvable:$true] %s409
      %412 = dma.vmem_to_hbm [thread:$0]  %s410, 128, %s11, [#allocation12]
    $region65: #{tpu_custom_call.1} parent=1 // pred_fallthru
      _
    // Predicated region
    $region66: #{tpu_custom_call.1} parent=1 // pred_check
      _
    $region67: #{tpu_custom_call.1} parent=1 // pred_check_branch
      %414 = sbr.rel (0) target = $region69
    $region68: #{tpu_custom_call.1} parent=1 // pred_region
      %s416 = ssub.s32 128, 128
      %417 = vsyncadd [#allocation12], %s416
      %s419 = sshll.u32 [#allocation13], 4
      %s420 = int_to_ptr.vmem [resolvable:$true] %s419
      %422 = dma.vmem_to_hbm [thread:$0]  %s420, 128, %s12, [#allocation12]
    $region69: #{tpu_custom_call.1} parent=1 // pred_fallthru
      _
    // Predicated region
    $region70: #{tpu_custom_call.1} parent=1 // pred_check
      _
    $region71: #{tpu_custom_call.1} parent=1 // pred_check_branch
      %424 = sbr.rel (0) target = $region73
    $region72: #{tpu_custom_call.1} parent=1 // pred_region
      %425 = dma.done [#allocation4], 128
    $region73: #{tpu_custom_call.1} parent=1 // pred_fallthru
      _
    // Predicated region
    $region74: #{tpu_custom_call.1} parent=1 // pred_check
      _
    $region75: #{tpu_custom_call.1} parent=1 // pred_check_branch
      %427 = sbr.rel (0) target = $region77
    $region76: #{tpu_custom_call.1} parent=1 // pred_region
      %428 = dma.done [#allocation12], 128
    $region77: #{tpu_custom_call.1} parent=1 // pred_fallthru
      _
    // Predicated region
    $region78: #{tpu_custom_call.1} parent=1 // pred_check
      _
    $region79: #{tpu_custom_call.1} parent=1 // pred_check_branch
      %430 = sbr.rel (0) target = $region81
    $region80: #{tpu_custom_call.1} parent=1 // pred_region
      %431 = dma.done [#allocation12], 128
    $region81: #{tpu_custom_call.1} parent=1 // pred_fallthru
      _
    %432 = vsyncpa [#allocation3], 1
    %433 = vsyncpa [#allocation6], 1
    %434 = vsyncpa [#allocation9], 1
    %435 = vsyncpa [#allocation4], 1
    %436 = vsyncpa [#allocation12], 1

</llo_original>
